<compile_context>
chip_gen: v7x
topology: tpu7x:2x2x1
jax: 0.10.0
libtpu: 0.0.40
codegen_flags: <defaults>
</compile_context>

<pallas_src>
import functools

import jax
import jax.numpy as jnp
from jax import lax
from jax.experimental import pallas as pl
from jax.experimental.pallas import tpu as pltpu

EPS = 1e-8
ITER_STEP = 2
LAMBDA_SOFTMAX = 9.0
NEG_INF = -1e30
# Matmul-operand / streamed-embedding dtype.  bf16 is the native MXU path on
# v5e/v6e/v7x and halves img/cap DMA bytes; accumulation stays f32.  Set to
# jnp.float32 for exact parity with the PyTorch float32 reference (with bf16
# expect ~1e-2 relative score deviation — validate retrieval metrics instead).
MATMUL_DTYPE = jnp.bfloat16


# ----------------------------------------------------------------------------
# Small helpers
# ----------------------------------------------------------------------------
def _l2norm(x, axis=-1):
    """Plain-JAX l2norm (PyTorch: x / (sqrt(sum x^2) + eps)). Used outside kernels."""
    return x / (jnp.sqrt(jnp.sum(x * x, axis=axis, keepdims=True)) + EPS)


def _l2norm_k(x, axis=-1):
    """In-kernel l2norm; the reciprocal lowers to the otherwise-idle EUP slot."""
    n = jnp.sqrt(jnp.sum(x * x, axis=axis, keepdims=True)) + EPS
    return x * pl.reciprocal(n, approx=True)


def _softmax_k(x, axis):
    m = jnp.max(x, axis=axis, keepdims=True)
    e = jnp.exp(x - m)
    return e * pl.reciprocal(jnp.sum(e, axis=axis, keepdims=True), approx=True)


def _leaky(x):
    return jnp.where(x >= 0, x, 0.1 * x)


def _mm(a, b):
    """(M,K)@(K,N) on the MXU with f32 accumulation."""
    return lax.dot_general(a.astype(MATMUL_DTYPE), b.astype(MATMUL_DTYPE),
                           (((1,), (0,)), ((), ())),
                           preferred_element_type=jnp.float32)


def _mm_nt(a, b):
    """(M,K)@(N,K)^T without materializing an explicit transpose."""
    return lax.dot_general(a.astype(MATMUL_DTYPE), b.astype(MATMUL_DTYPE),
                           (((1,), (1,)), ((), ())),
                           preferred_element_type=jnp.float32)


def _bmm(eq, a, b):
    """Batched einsum on the MXU (only for genuinely per-image operands)."""
    return jnp.einsum(eq, a.astype(MATMUL_DTYPE), b.astype(MATMUL_DTYPE),
                      preferred_element_type=jnp.float32)


def _bspec(shape, index_map, single_buffer):
    """BlockSpec; single_buffer requests 1 pipeline buffer for loop-invariant blocks."""
    if single_buffer:
        return pl.BlockSpec(shape, index_map, pipeline_mode=pl.Buffered(1))
    return pl.BlockSpec(shape, index_map)


def _pad_axis_to(x, axis, mult):
    n = x.shape[axis]
    p = (-n) % mult
    if p == 0:
        return x
    pads = [(0, 0)] * x.ndim
    pads[axis] = (0, p)
    return jnp.pad(x, pads)


# ----------------------------------------------------------------------------
# Pallas kernel 1: image encoder  (Linear(img_dim -> D) + l2norm over features)
# ----------------------------------------------------------------------------
def _img_enc_kernel(x_ref, w_ref, b_ref, o_ref):
    y = _mm(x_ref[...], w_ref[...]) + b_ref[...]
    n = jnp.sqrt(jnp.sum(y * y, axis=-1, keepdims=True)) + EPS
    o_ref[...] = y * pl.reciprocal(n, approx=True)


def encode_image(images, w_t, b, tm_max=512):
    """images (B, R, img_dim) -> (img_fc (B, D), img_emb (B, R, D))."""
    B, R, Din = images.shape
    D = w_t.shape[1]
    BR = B * R
    x2 = images.reshape(BR, Din).astype(jnp.float32)

    BR8 = BR + ((-BR) % 8)
    TM = min(BR8, tm_max)                              # row tile (multiple of 8)
    BRp = ((BR8 + TM - 1) // TM) * TM
    if BRp != BR:
        x2 = jnp.pad(x2, ((0, BRp - BR), (0, 0)))

    def build(single_buf):
        return pl.pallas_call(
            _img_enc_kernel,
            out_shape=jax.ShapeDtypeStruct((BRp, D), jnp.float32),
            grid=(BRp // TM,),
            in_specs=[
                pl.BlockSpec((TM, Din), lambda i: (i, 0)),        # rows streamed
                _bspec((Din, D), lambda i: (0, 0), single_buf),   # weight resident
                _bspec((1, D), lambda i: (0, 0), single_buf),     # bias resident
            ],
            out_specs=pl.BlockSpec((TM, D), lambda i: (i, 0)),
            compiler_params=pltpu.CompilerParams(
                dimension_semantics=("parallel",)),
        )(x2, w_t, b)

    try:
        out = build(True)
    except Exception:           # pipeline_mode=Buffered(1) unsupported -> default
        out = build(False)

    img_emb = out[:BR].reshape(B, R, D)
    img_fc = img_emb.mean(axis=1)   # matches PyTorch return (unused downstream)
    return img_fc, img_emb


# ----------------------------------------------------------------------------
# Pallas kernel 2: full IMRAM cross-attention scoring (t2i + i2t)
# grid = (image_block, caption); one caption x one image tile per step.
# ----------------------------------------------------------------------------
def _imram_kernel(cap_ref, img_ref,
                  wq_t2i_ref, ww_t2i_ref, b_t2i_ref,
                  wq_i2t_ref, ww_i2t_ref, b_i2t_ref,
                  out_ref, *, iter_step, smooth, r_real, t_real):
    cap = cap_ref[0]                         # (T, D)   matmul dtype
    imgs = img_ref[...]                      # (TN, R, D) matmul dtype
    tn, r, d = imgs.shape
    t = cap.shape[0]

    # Hoisted f32 copies for the elementwise / norm paths (matmuls keep bf16).
    cap_f = cap.astype(jnp.float32)
    imgs_f = imgs.astype(jnp.float32)
    imgs2 = imgs.reshape(tn * r, d)          # matmul operand (R padded -> aligned)

    wq_t2i = wq_t2i_ref[...]; ww_t2i = ww_t2i_ref[...]; b_t2i = b_t2i_ref[...]
    wq_i2t = wq_i2t_ref[...]; ww_i2t = ww_i2t_ref[...]; b_i2t = b_i2t_ref[...]

    # Validity masks for host-side padding of the region / word axes.
    word_b = None if t_real == t else (
        lax.broadcasted_iota(jnp.int32, (1, t), 1) < t_real)   # (1, T) bool
    reg_b = None if r_real == r else (
        lax.broadcasted_iota(jnp.int32, (1, r), 1) < r_real)   # (1, R) bool

    cap_nrm = jnp.sqrt(jnp.sum(cap_f * cap_f, axis=-1))        # (T,)
    imgs_nrm = jnp.sqrt(jnp.sum(imgs_f * imgs_f, axis=-1))     # (TN, R)

    # Iteration-0 raw attention is shared by both directions: one large
    # (TN*R, D) x (D, T) matmul instead of TN tiny batched matmuls.
    attn_raw0 = _mm_nt(imgs2, cap).reshape(tn, r, t)           # (TN, R, T)

    # ---------------- text -> image (Text_IMRAM) ----------------
    acc_t2i = jnp.zeros((tn,), jnp.float32)
    query_t = None                                             # (TN, T, D) after 1st update
    for j in range(iter_step):
        if j == 0:
            attn = attn_raw0
        else:                                                  # per-image query -> batched
            attn = _bmm('nrd,ntd->nrt', imgs, query_t)         # (TN, R, T)
        attn = _leaky(attn)
        if word_b is not None:                                 # padded words must not
            attn = jnp.where(word_b[None], attn, 0.0)          # perturb the word-l2norm
        attn = _l2norm_k(attn, axis=-1)                        # clipped_l2norm over words
        logits = attn * smooth
        if reg_b is not None:                                  # exclude padded regions
            logits = jnp.where(reg_b[:, :, None], logits, NEG_INF)
        attn_s = _softmax_k(logits, axis=1)                    # softmax over regions
        wctx = _bmm('nrt,nrd->ntd', attn_s, imgs)              # (TN, T, D)  per-image
        # cosine(cap_i_expand, wctx) over D, mean over (real) words
        w12 = jnp.sum(cap_f[None, :, :] * wctx, axis=-1)       # (TN, T)
        w2 = jnp.sqrt(jnp.sum(wctx * wctx, axis=-1))
        cosv = w12 * pl.reciprocal(jnp.maximum(cap_nrm[None, :] * w2, EPS),
                                   approx=True)
        if word_b is not None:
            acc_t2i = acc_t2i + jnp.sum(jnp.where(word_b, cosv, 0.0),
                                        axis=-1) * (1.0 / t_real)
        else:
            acc_t2i = acc_t2i + jnp.mean(cosv, axis=-1)
        if j < iter_step - 1:                                  # last update is unused
            wpre = _mm(wctx.reshape(tn * t, d), ww_t2i).reshape(tn, t, 2 * d)
            if j == 0:                                         # query == caption: shared
                qpre = _mm(cap, wq_t2i)[None]                  # (1, T, 2D)
                q_cur = cap_f[None, :, :]
            else:
                qpre = _mm(query_t.reshape(tn * t, d), wq_t2i).reshape(tn, t, 2 * d)
                q_cur = query_t
            pre = qpre + wpre + b_t2i                          # (TN, T, 2D)
            # TODO(synk): chunk this gate update over T with a fori_loop +
            # VMEM scratch so the (TN,T,2D) pre-activation never fully
            # materializes at production D; would allow a larger TN on v7x.
            h = jnp.tanh(pre[..., :d])
            g = jax.nn.sigmoid(pre[..., d:])
            query_t = _l2norm_k(q_cur * g + h * (1.0 - g), axis=-1)

    # ---------------- image -> text (Image_IMRAM) ----------------
    acc_i2t = jnp.zeros((tn,), jnp.float32)
    query2_mm = imgs2                                          # matmul operand
    query2_el = imgs_f.reshape(tn * r, d)                      # f32 elementwise operand
    for j in range(iter_step):
        if j == 0:
            attn = attn_raw0
        else:                                                  # context is shared caption
            attn = _mm_nt(query2_mm, cap).reshape(tn, r, t)
        attn = _leaky(attn)
        if reg_b is not None:                                  # padded regions must not
            attn = jnp.where(reg_b[:, :, None], attn, 0.0)     # perturb the region-l2norm
        attn = _l2norm_k(attn, axis=1)                         # clipped_l2norm over regions
        logits = attn * smooth
        if word_b is not None:                                 # exclude padded words
            logits = jnp.where(word_b[None], logits, NEG_INF)
        attn_s = _softmax_k(logits, axis=-1)                   # softmax over words
        wctx2 = _mm(attn_s.reshape(tn * r, t), cap)            # (TN*R, D) one big matmul
        wctx = wctx2.reshape(tn, r, d)
        # cosine(images, wctx) over D, mean over (real) regions
        w12 = jnp.sum(imgs_f * wctx, axis=-1)                  # (TN, R)
        w2 = jnp.sqrt(jnp.sum(wctx * wctx, axis=-1))
        cosv = w12 * pl.reciprocal(jnp.maximum(imgs_nrm * w2, EPS), approx=True)
        if reg_b is not None:
            acc_i2t = acc_i2t + jnp.sum(jnp.where(reg_b, cosv, 0.0),
                                        axis=-1) * (1.0 / r_real)
        else:
            acc_i2t = acc_i2t + jnp.mean(cosv, axis=-1)
        if j < iter_step - 1:
            pre = _mm(query2_mm, wq_i2t) + _mm(wctx2, ww_i2t) + b_i2t   # (TN*R, 2D)
            h = jnp.tanh(pre[:, :d])
            g = jax.nn.sigmoid(pre[:, d:])
            newq = query2_el * g + h * (1.0 - g)
            query2_el = _l2norm_k(newq, axis=-1)
            query2_mm = query2_el

    # lane-dense store: image axis on lanes
    out_ref[...] = (acc_t2i + acc_i2t).reshape(1, 1, 1, tn)


def _pack_gate(wl, bl, wg, bg):
    """Pack linear/gate weights so each gated-memory update is 2 big matmuls."""
    d = wl.shape[1]
    wq = jnp.concatenate([wl[:d], wg[:d]], axis=1).astype(MATMUL_DTYPE)   # x input_0
    ww = jnp.concatenate([wl[d:], wg[d:]], axis=1).astype(MATMUL_DTYPE)   # x input_1
    bb = jnp.concatenate([bl, bg], axis=1).astype(jnp.float32)            # (1, 2D)
    return wq, ww, bb


def _choose_tile(n_images, r, t, d, in_bytes):
    """Pick the image tile TN and vmem limit from the generation's VMEM capacity."""
    try:
        vmem_cap = int(getattr(pltpu.get_tpu_info(), "vmem_capacity_bytes", 0)) \
            or (64 << 20)
    except Exception:
        vmem_cap = 64 << 20          # conservative default (v7x per-core VMEM)
    budget = int(vmem_cap * 0.85)    # headroom for compiler scratch

    def est(tn, cw):
        bufs = (2 * t * d * in_bytes               # caption block (double-buffered)
                + cw * tn * r * d * in_bytes       # image tile
                + cw * 4 * d * 2 * d * in_bytes    # 4 packed gate weights
                + 2 * 2 * 2 * d * 4                # 2 biases (f32)
                + 2 * tn * 4)                      # output block
        # live per-step intermediates (f32): attention maps, weighted contexts,
        # gate pre-activations (dominant at large D) and the f32 upcasts.
        inter = 4 * (4 * tn * r * t + 6 * tn * t * d + 6 * tn * r * d)
        return bufs + inter

    n8 = n_images + ((-n_images) % 8)
    tn = min(n8, 512)
    while tn > 8 and est(tn, 1) > budget:
        tn -= 8
    if est(tn, 1) > budget:
        raise ValueError(
            "IMRAM tile does not fit in VMEM: ~%.1f MiB needed at TN=%d, budget "
            "%.1f MiB. Reduce embed_size/regions/words or chunk the gated-memory "
            "updates." % (est(tn, 1) / 2**20, tn, budget / 2**20))
    # limit sized for the worst case (constant blocks double-buffered fallback)
    vmem_limit = int(min(vmem_cap * 0.9, max(1.15 * est(tn, 2), 32 << 20)))
    return tn, vmem_limit


def imram_scores(img_emb, cap_emb, params):
    """img_emb (N, R, D), cap_emb (C, T, D) -> scores (C, N) f32."""
    N, R0, D = img_emb.shape
    C, T0, _ = cap_emb.shape
    in_bytes = jnp.dtype(MATMUL_DTYPE).itemsize

    # Pad region / word axes to sublane multiples so in-kernel reshapes stay
    # tile aligned (16 rows per packed vreg tile for 16-bit operands).
    sub_mult = 16 if in_bytes == 2 else 8
    img_p = _pad_axis_to(img_emb, 1, sub_mult)
    cap_p = _pad_axis_to(cap_emb, 1, sub_mult)
    R, T = img_p.shape[1], cap_p.shape[1]

    TN, vmem_limit = _choose_tile(N, R, T, D, in_bytes)
    NB = pl.cdiv(N, TN)
    NP = NB * TN
    if NP != N:
        img_p = jnp.pad(img_p, ((0, NP - N), (0, 0), (0, 0)))

    # Half-width DMA blocks for the embeddings (accumulation stays f32).
    img_in = img_p.astype(MATMUL_DTYPE)
    cap_in = cap_p.astype(MATMUL_DTYPE)

    wq_t2i, ww_t2i, b_t2i = _pack_gate(params['wl_t2i'], params['bl_t2i'],
                                       params['wg_t2i'], params['bg_t2i'])
    wq_i2t, ww_i2t, b_i2t = _pack_gate(params['wl_i2t'], params['bl_i2t'],
                                       params['wg_i2t'], params['bg_i2t'])

    kern = functools.partial(_imram_kernel, iter_step=ITER_STEP,
                             smooth=LAMBDA_SOFTMAX, r_real=R0, t_real=T0)

    # Grid order (image-block, caption): caption is the fastest axis, so the
    # (TN,R,D) image tile keeps the same block index between consecutive steps.
    # Megacore splits NB (keeps per-core image-tile residency); the caption
    # axis is only marked parallel when there is a single image block.
    sem = ("parallel", "parallel" if NB == 1 else "arbitrary")

    def build(single_buf):
        w_spec = _bspec((D, 2 * D), lambda nb, c: (0, 0), single_buf)
        b_spec = _bspec((1, 2 * D), lambda nb, c: (0, 0), single_buf)
        img_spec = _bspec((TN, R, D), lambda nb, c: (nb, 0, 0), single_buf)
        cap_spec = pl.BlockSpec((1, T, D), lambda nb, c: (c, 0, 0))
        out_spec = pl.BlockSpec((1, 1, 1, TN), lambda nb, c: (c, nb, 0, 0))
        return pl.pallas_call(
            kern,
            out_shape=jax.ShapeDtypeStruct((C, NB, 1, TN), jnp.float32),
            grid=(NB, C),
            in_specs=[cap_spec, img_spec,
                      w_spec, w_spec, b_spec,       # t2i packed weights
                      w_spec, w_spec, b_spec],      # i2t packed weights
            out_specs=out_spec,
            compiler_params=pltpu.CompilerParams(
                dimension_semantics=sem, vmem_limit_bytes=vmem_limit),
        )(cap_in, img_in, wq_t2i, ww_t2i, b_t2i, wq_i2t, ww_i2t, b_i2t)

    try:
        out = build(True)
    except Exception:           # pipeline_mode=Buffered(1) unsupported -> default
        out = build(False)

    # TODO(synk): PyTorch casts similarities to double; kept f32 here.
    return out.reshape(C, NB * TN)[:, :N]            # (C, N) training layout


# ----------------------------------------------------------------------------
# Text encoder (embedding + bi-GRU): plain JAX glue.
# ----------------------------------------------------------------------------
# TODO(synk): GRU recurrence + embedding gather kept in plain JAX (lax.scan);
# the length-T sequential dependence has no clean static-tile Pallas mapping.
def _gru_layer(x, w_ih, w_hh, b_ih, b_hh, reverse=False):
    B, T, _ = x.shape
    H = w_hh.shape[1]
    xs = jnp.swapaxes(x, 0, 1)          # (T, B, Din)
    if reverse:
        xs = xs[::-1]
    h0 = jnp.zeros((B, H), jnp.float32)

    def step(h, xt):
        gi = xt @ w_ih.T + b_ih
        gh = h @ w_hh.T + b_hh
        ir, iz, inn = jnp.split(gi, 3, axis=-1)
        hr, hz, hn = jnp.split(gh, 3, axis=-1)
        rg = jax.nn.sigmoid(ir + hr)
        zg = jax.nn.sigmoid(iz + hz)
        ng = jnp.tanh(inn + rg * hn)
        h_new = (1.0 - zg) * ng + zg * h
        return h_new, h_new

    h_last, outs = lax.scan(step, h0, xs)
    outs = jnp.swapaxes(outs, 0, 1)     # (B, T, H)
    if reverse:
        outs = outs[:, ::-1]
    return outs, h_last


def encode_text(params, captions, lengths):
    # all lengths == T here, so sort/pack/pad_packed are identities
    x_emb = params['embed'][captions]   # (B, T, word_dim)
    out_f, h_f = _gru_layer(x_emb, params['gru_wih_f'], params['gru_whh_f'],
                            params['gru_bih_f'], params['gru_bhh_f'], False)
    out_b, h_b = _gru_layer(x_emb, params['gru_wih_b'], params['gru_whh_b'],
                            params['gru_bih_b'], params['gru_bhh_b'], True)
    cap_emb = (out_f + out_b) / 2.0     # bi-GRU halves averaged
    ht = (h_f + h_b) / 2.0
    cap_emb = _l2norm(cap_emb, axis=-1)
    ht = _l2norm(ht, axis=-1)
    return ht, cap_emb, lengths


# ----------------------------------------------------------------------------
# Full SCAN forward
# ----------------------------------------------------------------------------
def scan_forward(params, images, captions, lengths):
    img_fc, img_emb = encode_image(images, params['img_w_t'], params['img_b'])
    ht, cap_emb, cap_lens = encode_text(params, captions, lengths)
    scores = imram_scores(img_emb, cap_emb, params)     # full_IMRAM: t2i + i2t
    return scores


# ----------------------------------------------------------------------------
# Deterministic parameter construction
# ----------------------------------------------------------------------------
def make_params(key, img_dim, embed_size, vocab_size, word_dim):
    D, H = embed_size, embed_size
    ks = jax.random.split(key, 16)
    u = lambda k, shape, rr: jax.random.uniform(k, shape, jnp.float32, -rr, rr)

    r_fc = (6.0 ** 0.5) / ((img_dim + D) ** 0.5)        # xavier-uniform (fc_local)
    r_gru = 1.0 / (H ** 0.5)
    r_lin = 1.0 / ((2 * D) ** 0.5)

    return dict(
        img_w_t=u(ks[0], (img_dim, D), r_fc),
        img_b=jnp.zeros((1, D), jnp.float32),
        embed=u(ks[1], (vocab_size, word_dim), 0.1),
        gru_wih_f=u(ks[2], (3 * H, word_dim), r_gru),
        gru_whh_f=u(ks[3], (3 * H, H), r_gru),
        gru_bih_f=u(ks[4], (3 * H,), r_gru),
        gru_bhh_f=u(ks[5], (3 * H,), r_gru),
        gru_wih_b=u(ks[6], (3 * H, word_dim), r_gru),
        gru_whh_b=u(ks[7], (3 * H, H), r_gru),
        gru_bih_b=u(ks[8], (3 * H,), r_gru),
        gru_bhh_b=u(ks[9], (3 * H,), r_gru),
        wl_t2i=u(ks[10], (2 * D, D), r_lin),
        bl_t2i=jnp.zeros((1, D), jnp.float32),
        wg_t2i=u(ks[11], (2 * D, D), r_lin),
        bg_t2i=jnp.zeros((1, D), jnp.float32),
        wl_i2t=u(ks[12], (2 * D, D), r_lin),
        bl_i2t=jnp.zeros((1, D), jnp.float32),
        wg_i2t=u(ks[13], (2 * D, D), r_lin),
        bg_i2t=jnp.zeros((1, D), jnp.float32),
    )


if __name__ == "__main__":
    B = 2            # n_image == n_caption (paired batch)
    R = 8            # image regions
    IMG_DIM = 16     # precomputed image feature dim
    D = 32           # embed_size
    VOCAB = 50
    WORD_DIM = 32
    T = 8            # caption length (all captions full length)

    key = jax.random.PRNGKey(0)
    k_img, k_cap, k_par = jax.random.split(key, 3)

    images = jax.random.normal(k_img, (B, R, IMG_DIM), jnp.float32)
    captions = jax.random.randint(k_cap, (B, T), 0, VOCAB, jnp.int32)
    lengths = jnp.full((B,), T, jnp.int32)

    params = make_params(k_par, IMG_DIM, D, VOCAB, WORD_DIM)

    scores = scan_forward(params, images, captions, lengths)
    jax.block_until_ready(scores)
    assert scores.shape == (B, B)
    assert bool(jnp.all(jnp.isfinite(scores)))
    print("KERNEL_OK")
</pallas_src>

<mosaic_0001>
module attributes {stable_mosaic.version = 11 : i64} {
  func.func @_img_enc_kernel(%arg0: i32, %arg1: memref<16x16xf32, #tpu.memory_space<vmem>>, %arg2: memref<16x32xf32, #tpu.memory_space<vmem>>, %arg3: memref<1x32xf32, #tpu.memory_space<vmem>>, %arg4: memref<16x32xf32, #tpu.memory_space<vmem>>) attributes {dimension_semantics = [#tpu.dimension_semantics<parallel>], iteration_bounds = array<i64: 1>, scalar_prefetch = 0 : i64, scratch_operands = 0 : i64, tpu.core_type = #tpu.core_type<tc>, window_params = [{transform_indices = @transform_0, window_bounds = array<i64: 16, 16>}, {pipeline_mode = #tpu.pipeline_mode<synchronous>, transform_indices = @transform_1, window_bounds = array<i64: 16, 32>}, {pipeline_mode = #tpu.pipeline_mode<synchronous>, transform_indices = @transform_2, window_bounds = array<i64: 1, 32>}, {transform_indices = @transform_3, window_bounds = array<i64: 16, 32>}]} {
    %c0 = arith.constant 0 : index
    %c0_0 = arith.constant 0 : index
    %0 = vector.load %arg1[%c0, %c0_0] : memref<16x16xf32, #tpu.memory_space<vmem>>, vector<16x16xf32>
    %c0_1 = arith.constant 0 : index
    %c0_2 = arith.constant 0 : index
    %1 = vector.load %arg2[%c0_1, %c0_2] : memref<16x32xf32, #tpu.memory_space<vmem>>, vector<16x32xf32>
    %2 = arith.truncf %0 : vector<16x16xf32> to vector<16x16xbf16>
    %3 = arith.truncf %1 : vector<16x32xf32> to vector<16x32xbf16>
    %cst = arith.constant dense<0.000000e+00> : vector<16x32xf32>
    %4 = tpu.matmul %2, %3, %cst {dimension_numbers = #tpu.dot_dimension_numbers<[1], [0], [0], [1], [0, 0, 1, 1], [], []>} : vector<16x16xbf16>, vector<16x32xbf16>, vector<16x32xf32> -> vector<16x32xf32>
    %c0_3 = arith.constant 0 : index
    %c0_4 = arith.constant 0 : index
    %5 = vector.load %arg3[%c0_3, %c0_4] : memref<1x32xf32, #tpu.memory_space<vmem>>, vector<1x32xf32>
    %6 = vector.broadcast %5 : vector<1x32xf32> to vector<16x32xf32>
    %7 = arith.addf %4, %6 : vector<16x32xf32>
    %8 = arith.mulf %7, %7 : vector<16x32xf32>
    %cst_5 = arith.constant dense<0.000000e+00> : vector<16xf32>
    %9 = vector.multi_reduction <add>, %8, %cst_5 [1] : vector<16x32xf32> to vector<16xf32>
    %10 = vector.shape_cast %9 : vector<16xf32> to vector<16x1xf32>
    %11 = math.sqrt %10 : vector<16x1xf32>
    %cst_6 = arith.constant 9.99999993E-9 : f32
    %12 = vector.broadcast %cst_6 : f32 to vector<16x1xf32>
    %13 = arith.addf %11, %12 : vector<16x1xf32>
    %14 = tpu.reciprocal %13 {approx = true} : vector<16x1xf32> -> vector<16x1xf32>
    %15 = vector.broadcast %14 : vector<16x1xf32> to vector<16x32xf32>
    %16 = arith.mulf %7, %15 : vector<16x32xf32>
    %c0_7 = arith.constant 0 : index
    %c0_8 = arith.constant 0 : index
    %17 = vector.load %arg4[%c0_7, %c0_8] : memref<16x32xf32, #tpu.memory_space<vmem>>, vector<16x32xf32>
    tpu.vector_store %arg4[%c0_7, %c0_8], %16 {strides = array<i32>} : memref<16x32xf32, #tpu.memory_space<vmem>>, vector<16x32xf32>,
    return
  }
  func.func @transform_0(%arg0: i32) -> (i32, i32) {
    %c0_i32 = arith.constant 0 : i32
    %c0_i32_0 = arith.constant 0 : i32
    return %arg0, %c0_i32 : i32, i32
  }
  func.func @transform_1(%arg0: i32) -> (i32, i32) {
    %c0_i32 = arith.constant 0 : i32
    %c0_i32_0 = arith.constant 0 : i32
    %c0_i32_1 = arith.constant 0 : i32
    return %c0_i32, %c0_i32_0 : i32, i32
  }
  func.func @transform_2(%arg0: i32) -> (i32, i32) {
    %c0_i32 = arith.constant 0 : i32
    %c0_i32_0 = arith.constant 0 : i32
    %c0_i32_1 = arith.constant 0 : i32
    return %c0_i32, %c0_i32_0 : i32, i32
  }
  func.func @transform_3(%arg0: i32) -> (i32, i32) {
    %c0_i32 = arith.constant 0 : i32
    %c0_i32_0 = arith.constant 0 : i32
    return %arg0, %c0_i32 : i32, i32
  }
}

module attributes {stable_mosaic.version = 11 : i64} {
  func.func @_img_enc_kernel(%arg0: i32, %arg1: memref<16x16xf32, #tpu.memory_space<vmem>>, %arg2: memref<16x32xf32, #tpu.memory_space<vmem>>, %arg3: memref<1x32xf32, #tpu.memory_space<vmem>>, %arg4: memref<16x32xf32, #tpu.memory_space<vmem>>) attributes {dimension_semantics = [#tpu.dimension_semantics<parallel>], iteration_bounds = array<i64: 1>, scalar_prefetch = 0 : i64, scratch_operands = 0 : i64, tpu.core_type = #tpu.core_type<tc>, window_params = [{transform_indices = @transform_0, window_bounds = array<i64: 16, 16>}, {pipeline_mode = #tpu.pipeline_mode<synchronous>, transform_indices = @transform_1, window_bounds = array<i64: 16, 32>}, {pipeline_mode = #tpu.pipeline_mode<synchronous>, transform_indices = @transform_2, window_bounds = array<i64: 1, 32>}, {transform_indices = @transform_3, window_bounds = array<i64: 16, 32>}]} {
    %c0 = arith.constant 0 : index
    %c0_0 = arith.constant 0 : index
    %0 = vector.load %arg1[%c0, %c0_0] : memref<16x16xf32, #tpu.memory_space<vmem>>, vector<16x16xf32>
    %c0_1 = arith.constant 0 : index
    %c0_2 = arith.constant 0 : index
    %1 = vector.load %arg2[%c0_1, %c0_2] : memref<16x32xf32, #tpu.memory_space<vmem>>, vector<16x32xf32>
    %2 = arith.truncf %0 : vector<16x16xf32> to vector<16x16xbf16>
    %3 = arith.truncf %1 : vector<16x32xf32> to vector<16x32xbf16>
    %cst = arith.constant dense<0.000000e+00> : vector<16x32xf32>
    %4 = tpu.matmul %2, %3, %cst {dimension_numbers = #tpu.dot_dimension_numbers<[1], [0], [0], [1], [0, 0, 1, 1], [], []>} : vector<16x16xbf16>, vector<16x32xbf16>, vector<16x32xf32> -> vector<16x32xf32>
    %c0_3 = arith.constant 0 : index
    %c0_4 = arith.constant 0 : index
    %5 = vector.load %arg3[%c0_3, %c0_4] : memref<1x32xf32, #tpu.memory_space<vmem>>, vector<1x32xf32>
    %6 = vector.broadcast %5 : vector<1x32xf32> to vector<16x32xf32>
    %7 = arith.addf %4, %6 : vector<16x32xf32>
    %8 = arith.mulf %7, %7 : vector<16x32xf32>
    %cst_5 = arith.constant dense<0.000000e+00> : vector<16xf32>
    %9 = vector.multi_reduction <add>, %8, %cst_5 [1] : vector<16x32xf32> to vector<16xf32>
    %10 = vector.shape_cast %9 : vector<16xf32> to vector<16x1xf32>
    %11 = math.sqrt %10 : vector<16x1xf32>
    %cst_6 = arith.constant 9.99999993E-9 : f32
    %12 = vector.broadcast %cst_6 : f32 to vector<16x1xf32>
    %13 = arith.addf %11, %12 : vector<16x1xf32>
    %14 = tpu.reciprocal %13 {approx = true} : vector<16x1xf32> -> vector<16x1xf32>
    %15 = vector.broadcast %14 : vector<16x1xf32> to vector<16x32xf32>
    %16 = arith.mulf %7, %15 : vector<16x32xf32>
    %c0_7 = arith.constant 0 : index
    %c0_8 = arith.constant 0 : index
    %17 = vector.load %arg4[%c0_7, %c0_8] : memref<16x32xf32, #tpu.memory_space<vmem>>, vector<16x32xf32>
    tpu.vector_store %arg4[%c0_7, %c0_8], %16 {strides = array<i32>} : memref<16x32xf32, #tpu.memory_space<vmem>>, vector<16x32xf32>,
    return
  }
  func.func @transform_0(%arg0: i32) -> (i32, i32) {
    %c0_i32 = arith.constant 0 : i32
    %c0_i32_0 = arith.constant 0 : i32
    return %arg0, %c0_i32 : i32, i32
  }
  func.func @transform_1(%arg0: i32) -> (i32, i32) {
    %c0_i32 = arith.constant 0 : i32
    %c0_i32_0 = arith.constant 0 : i32
    %c0_i32_1 = arith.constant 0 : i32
    return %c0_i32, %c0_i32_0 : i32, i32
  }
  func.func @transform_2(%arg0: i32) -> (i32, i32) {
    %c0_i32 = arith.constant 0 : i32
    %c0_i32_0 = arith.constant 0 : i32
    %c0_i32_1 = arith.constant 0 : i32
    return %c0_i32, %c0_i32_0 : i32, i32
  }
  func.func @transform_3(%arg0: i32) -> (i32, i32) {
    %c0_i32 = arith.constant 0 : i32
    %c0_i32_0 = arith.constant 0 : i32
    return %arg0, %c0_i32 : i32, i32
  }
}

</mosaic_0001>

<llo_original>
// kernel: tpu_custom_call.1
$region0: #{tpu_custom_call.1}
  #allocation0 [shape = 'u32[]', space=smem, size = 0x4, offset = 0x4, fixed_abs, tag = 'smem constant byte address 0x4 - core index']
  #allocation1 [shape = 'u32[144,128]{1,0:T(1,128)}', space=vmem, size = 0x12000, scoped, tag = 'internal scratch']
  %s0 = inlined_call_operand.hbm [shape: f32[16,16], index: 0, kind: input, shape index: {}]
  %s1 = inlined_call_operand.hbm [shape: f32[16,32], index: 1, kind: input, shape index: {}]
  %s2 = inlined_call_operand.vmem [shape: f32[1,32], index: 2, kind: input, shape index: {}]
  %s3 = inlined_call_operand.hbm [shape: f32[16,32], index: 3, kind: output, shape index: {}]
  %s4 = sld [smem:[#allocation0]]
  $region30: #{tpu_custom_call.1} parent=0
    _
  %s6 = ssub.s32 1, %s4
  %s7 = scalar_select 0, %s6, %s4
  $region1: #{tpu_custom_call.1} parent=0
    #allocation2 [shape = 'u8[8192]{0}', space=vmem, size = 0x2000, scoped, tag = 'input window, operand 0, single buffered']
    #allocation3 [shape = 's32[1]{0}', space=sflag, size = 0x4, scoped, tag = 'scoped memory for tpu_custom_call.1']
    #allocation4 [shape = 's32[1]{0}', space=sflag, size = 0x4, scoped, tag = 'scoped memory for tpu_custom_call.1']
    #allocation5 [shape = 'u8[8192]{0}', space=vmem, size = 0x2000, scoped, tag = 'input window, operand 1, single buffered']
    #allocation6 [shape = 's32[1]{0}', space=sflag, size = 0x4, scoped, tag = 'scoped memory for tpu_custom_call.1']
    #allocation7 [shape = 'u8[8192]{0}', space=vmem, size = 0x2000, scoped, tag = 'output window, operand 0, single buffered']
    %8 = vsyncpa [#allocation3], 0
    %9 = vsyncpa [#allocation6], 0
    %10 = vsyncpa [#allocation4], 0
    // Predicated region
    $region2: #{tpu_custom_call.1} parent=1 // pred_check
      _
    $region3: #{tpu_custom_call.1} parent=1 // pred_check_branch
      %12 = sbr.rel (0) target = $region5
    $region4: #{tpu_custom_call.1} parent=1 // pred_region
      %s14 = ssub.s32 256, 256
      %15 = vsyncadd [#allocation3], %s14
      %s16 = sshll.u32 [#allocation2], 4
      %s17 = int_to_ptr.vmem [resolvable:$true] %s16
      %22 = dma.hbm_to_vmem [thread:$0]  %s0, 256, %s17, [#allocation3], 128, 128, 8
    $region5: #{tpu_custom_call.1} parent=1 // pred_fallthru
      _
    // Predicated region
    $region6: #{tpu_custom_call.1} parent=1 // pred_check
      _
    $region7: #{tpu_custom_call.1} parent=1 // pred_check_branch
      %24 = sbr.rel (0) target = $region9
    $region8: #{tpu_custom_call.1} parent=1 // pred_region
      %s26 = ssub.s32 256, 256
      %27 = vsyncadd [#allocation6], %s26
      %s28 = sshll.u32 [#allocation5], 4
      %s29 = int_to_ptr.vmem [resolvable:$true] %s28
      %34 = dma.hbm_to_vmem [thread:$0]  %s1, 256, %s29, [#allocation6], 128, 128, 8
    $region9: #{tpu_custom_call.1} parent=1 // pred_fallthru
      _
    // Predicated region
    $region10: #{tpu_custom_call.1} parent=1 // pred_check
      _
    $region11: #{tpu_custom_call.1} parent=1 // pred_check_branch
      %36 = sbr.rel (0) target = $region13
    $region12: #{tpu_custom_call.1} parent=1 // pred_region
      _
    $region13: #{tpu_custom_call.1} parent=1 // pred_fallthru
      _
    // Predicated region
    $region14: #{tpu_custom_call.1} parent=1 // pred_check
      _
    $region15: #{tpu_custom_call.1} parent=1 // pred_check_branch
      %38 = sbr.rel (0) target = $region17
    $region16: #{tpu_custom_call.1} parent=1 // pred_region
      %39 = dma.done [#allocation3], 256
    $region17: #{tpu_custom_call.1} parent=1 // pred_fallthru
      _
    // Predicated region
    $region18: #{tpu_custom_call.1} parent=1 // pred_check
      _
    $region19: #{tpu_custom_call.1} parent=1 // pred_check_branch
      %41 = sbr.rel (0) target = $region21
    $region20: #{tpu_custom_call.1} parent=1 // pred_region
      %42 = dma.done [#allocation6], 256
    $region21: #{tpu_custom_call.1} parent=1 // pred_fallthru
      _
    %v44 = vld [vmem:[#allocation2] sm:$0xff]
    %v45 = vld [vmem:[#allocation2 + $0x8] sm:$0xff]
    %v46 = vld [vmem:[#allocation5] sm:$0xff]
    %v47 = vld [vmem:[#allocation5 + $0x8] sm:$0xff]
    %v48 = vpack.c.bf16 %v45, %v44
    %v49 = vpack.c.bf16 %v47, %v46
    %v50 = vld [vmem:[%s2] sm:$0x1]
    %v52 = vlaneseq
    %v53 = vshrl.u32 %v52, 7
    %v54 = vsub.s32 0, %v53
    %v55 = vrot.slane %v50, %v54
    %vm57 = vcmask 130048
    %v59 = vsel %vm57, %v48, 0
    %61 = vmatprep.subr.bf16.mxu0 0
    %62 = vmatpush1.bf16.msra.mxu0 %v49
    %63 = vmatprep.subr.bf16.mxu0 0
    %64 = vmatpush1.bf16.msra.mxu0 0
    %65 = vmatprep.subr.bf16.mxu0 0
    %66 = vmatpush1.bf16.msra.mxu0 0
    %67 = vmatprep.subr.bf16.mxu0 0
    %68 = vmatpush1.bf16.msra.mxu0 0
    %69 = vmatprep.subr.bf16.mxu0 0
    %70 = vmatpush1.bf16.msra.mxu0 0
    %71 = vmatprep.subr.bf16.mxu0 0
    %72 = vmatpush1.bf16.msra.mxu0 0
    %73 = vmatprep.subr.bf16.mxu0 0
    %74 = vmatpush1.bf16.msra.mxu0 0
    %75 = vmatprep.subr.bf16.mxu0 0
    %76 = vmatpush1.bf16.msra.mxu0 0
    %77 = vmatprep.subr.bf16.mxu0 0
    %78 = vmatpush1.bf16.msra.mxu0 0
    %79 = vmatprep.subr.bf16.mxu0 0
    %80 = vmatpush1.bf16.msra.mxu0 0
    %81 = vmatprep.subr.bf16.mxu0 0
    %82 = vmatpush1.bf16.msra.mxu0 0
    %83 = vmatprep.subr.bf16.mxu0 0
    %84 = vmatpush1.bf16.msra.mxu0 0
    %85 = vmatprep.subr.bf16.mxu0 0
    %86 = vmatpush1.bf16.msra.mxu0 0
    %87 = vmatprep.subr.bf16.mxu0 0
    %88 = vmatpush1.bf16.msra.mxu0 0
    %89 = vmatprep.subr.bf16.mxu0 0
    %90 = vmatpush1.bf16.msra.mxu0 0
    %91 = vmatprep.subr.bf16.mxu0 0
    %92 = vmatpush1.bf16.msra.mxu0 0
    %93 = vmatprep.mubr.bf16.mxu0 0
    %94 = vmatmul.mubr.bf16.gmra.mrb[0].mxu0 %v59
    %v95 = vpop.f32.mrb[0].mxu0
    %v96 = vadd.f32 %v55, %v95
    %v97 = vpop.f32.mrb[0].mxu0
    %v98 = vpop.f32.mrb[0].mxu0
    %v99 = vadd.f32 %v55, %v98
    %v100 = vpop.f32.mrb[0].mxu0
    %101 = vdwg.mxu0
    %v102 = vmul.f32 %v96, %v96
    %v103 = vmul.f32 %v99, %v99
    %vm104 = vcmask 261120
    %v105 = vsel %vm104, %v102, 0.0
    %106 = vadd.xlane.f32.xlu0 %v105
    %v107 = vpop.xlane.xlu0 %106
    %v108 = vsel %vm104, %v103, 0.0
    %109 = vadd.xlane.f32.xlu0 %v108
    %v110 = vpop.xlane.xlu0 %109
    %v111 = vrsqrt.pop %v107
    %v112 = vmul.f32 %v107, %v111
    %vm113 = vcmp.eq.f32.partialorder %v107, inf
    %v114 = vsel %vm113, %v107, %v112
    %vm115 = vcmp.eq.f32.partialorder %v107, 0.0
    %v116 = vand.u32 %v107, 2147483648
    %v117 = vsel %vm115, %v116, %v114
    %v118 = vrsqrt.pop %v110
    %v119 = vmul.f32 %v110, %v118
    %vm120 = vcmp.eq.f32.partialorder %v110, inf
    %v121 = vsel %vm120, %v110, %v119
    %vm122 = vcmp.eq.f32.partialorder %v110, 0.0
    %v123 = vand.u32 %v110, 2147483648
    %v124 = vsel %vm122, %v123, %v121
    %v125 = vadd.f32 %v117, 1e-08
    %v126 = vadd.f32 %v124, 1e-08
    %v127 = vrcp.pop %v125
    %v128 = vrcp.pop %v126
    %v129 = vmul.f32 %v96, %v127
    %v130 = vmul.f32 %v99, %v128
    %131 = vst.msk [vmem:[#allocation7] sm:$0xff] %vm104, %v129
    %132 = vst.msk [vmem:[#allocation7 + $0x8] sm:$0xff] %vm104, %v130
    // Predicated region
    $region22: #{tpu_custom_call.1} parent=1 // pred_check
      _
    $region23: #{tpu_custom_call.1} parent=1 // pred_check_branch
      %134 = sbr.rel (0) target = $region25
    $region24: #{tpu_custom_call.1} parent=1 // pred_region
      %s136 = ssub.s32 256, 256
      %137 = vsyncadd [#allocation4], %s136
      %s138 = sshll.u32 [#allocation7], 4
      %s139 = int_to_ptr.vmem [resolvable:$true] %s138
      %144 = dma.vmem_to_hbm [thread:$0]  %s139, 256, %s3, [#allocation4], 128, 128, 8
    $region25: #{tpu_custom_call.1} parent=1 // pred_fallthru
      _
    // Predicated region
    $region26: #{tpu_custom_call.1} parent=1 // pred_check
      _
    $region27: #{tpu_custom_call.1} parent=1 // pred_check_branch
      %146 = sbr.rel (0) target = $region29
    $region28: #{tpu_custom_call.1} parent=1 // pred_region
      %147 = dma.done [#allocation4], 256
    $region29: #{tpu_custom_call.1} parent=1 // pred_fallthru
      _
    %148 = vsyncpa [#allocation3], 1
    %149 = vsyncpa [#allocation6], 1
    %150 = vsyncpa [#allocation4], 1

// kernel: tpu_custom_call.1
$region0: #{tpu_custom_call.1}
  #allocation0 [shape = 'u32[]', space=smem, size = 0x4, offset = 0x4, fixed_abs, tag = 'smem constant byte address 0x4 - core index']
  #allocation1 [shape = 'u32[144,128]{1,0:T(1,128)}', space=vmem, size = 0x12000, scoped, tag = 'internal scratch']
  %s0 = inlined_call_operand.hbm [shape: f32[16,16], index: 0, kind: input, shape index: {}]
  %s1 = inlined_call_operand.hbm [shape: f32[16,32], index: 1, kind: input, shape index: {}]
  %s2 = inlined_call_operand.vmem [shape: f32[1,32], index: 2, kind: input, shape index: {}]
  %s3 = inlined_call_operand.hbm [shape: f32[16,32], index: 3, kind: output, shape index: {}]
  %s4 = sld [smem:[#allocation0]]
  $region30: #{tpu_custom_call.1} parent=0
    _
  %s6 = ssub.s32 1, %s4
  %s7 = scalar_select 0, %s6, %s4
  $region1: #{tpu_custom_call.1} parent=0
    #allocation2 [shape = 'u8[8192]{0}', space=vmem, size = 0x2000, scoped, tag = 'input window, operand 0, single buffered']
    #allocation3 [shape = 's32[1]{0}', space=sflag, size = 0x4, scoped, tag = 'scoped memory for tpu_custom_call.1']
    #allocation4 [shape = 's32[1]{0}', space=sflag, size = 0x4, scoped, tag = 'scoped memory for tpu_custom_call.1']
    #allocation5 [shape = 'u8[8192]{0}', space=vmem, size = 0x2000, scoped, tag = 'input window, operand 1, single buffered']
    #allocation6 [shape = 's32[1]{0}', space=sflag, size = 0x4, scoped, tag = 'scoped memory for tpu_custom_call.1']
    #allocation7 [shape = 'u8[8192]{0}', space=vmem, size = 0x2000, scoped, tag = 'output window, operand 0, single buffered']
    %8 = vsyncpa [#allocation3], 0
    %9 = vsyncpa [#allocation6], 0
    %10 = vsyncpa [#allocation4], 0
    // Predicated region
    $region2: #{tpu_custom_call.1} parent=1 // pred_check
      _
    $region3: #{tpu_custom_call.1} parent=1 // pred_check_branch
      %12 = sbr.rel (0) target = $region5
    $region4: #{tpu_custom_call.1} parent=1 // pred_region
      %s14 = ssub.s32 256, 256
      %15 = vsyncadd [#allocation3], %s14
      %s16 = sshll.u32 [#allocation2], 4
      %s17 = int_to_ptr.vmem [resolvable:$true] %s16
      %22 = dma.hbm_to_vmem [thread:$0]  %s0, 256, %s17, [#allocation3], 128, 128, 8
    $region5: #{tpu_custom_call.1} parent=1 // pred_fallthru
      _
    // Predicated region
    $region6: #{tpu_custom_call.1} parent=1 // pred_check
      _
    $region7: #{tpu_custom_call.1} parent=1 // pred_check_branch
      %24 = sbr.rel (0) target = $region9
    $region8: #{tpu_custom_call.1} parent=1 // pred_region
      %s26 = ssub.s32 256, 256
      %27 = vsyncadd [#allocation6], %s26
      %s28 = sshll.u32 [#allocation5], 4
      %s29 = int_to_ptr.vmem [resolvable:$true] %s28
      %34 = dma.hbm_to_vmem [thread:$0]  %s1, 256, %s29, [#allocation6], 128, 128, 8
    $region9: #{tpu_custom_call.1} parent=1 // pred_fallthru
      _
    // Predicated region
    $region10: #{tpu_custom_call.1} parent=1 // pred_check
      _
    $region11: #{tpu_custom_call.1} parent=1 // pred_check_branch
      %36 = sbr.rel (0) target = $region13
    $region12: #{tpu_custom_call.1} parent=1 // pred_region
      _
    $region13: #{tpu_custom_call.1} parent=1 // pred_fallthru
      _
    // Predicated region
    $region14: #{tpu_custom_call.1} parent=1 // pred_check
      _
    $region15: #{tpu_custom_call.1} parent=1 // pred_check_branch
      %38 = sbr.rel (0) target = $region17
    $region16: #{tpu_custom_call.1} parent=1 // pred_region
      %39 = dma.done [#allocation3], 256
    $region17: #{tpu_custom_call.1} parent=1 // pred_fallthru
      _
    // Predicated region
    $region18: #{tpu_custom_call.1} parent=1 // pred_check
      _
    $region19: #{tpu_custom_call.1} parent=1 // pred_check_branch
      %41 = sbr.rel (0) target = $region21
    $region20: #{tpu_custom_call.1} parent=1 // pred_region
      %42 = dma.done [#allocation6], 256
    $region21: #{tpu_custom_call.1} parent=1 // pred_fallthru
      _
    %v44 = vld [vmem:[#allocation2] sm:$0xff]
    %v45 = vld [vmem:[#allocation2 + $0x8] sm:$0xff]
    %v46 = vld [vmem:[#allocation5] sm:$0xff]
    %v47 = vld [vmem:[#allocation5 + $0x8] sm:$0xff]
    %v48 = vpack.c.bf16 %v45, %v44
    %v49 = vpack.c.bf16 %v47, %v46
    %v50 = vld [vmem:[%s2] sm:$0x1]
    %v52 = vlaneseq
    %v53 = vshrl.u32 %v52, 7
    %v54 = vsub.s32 0, %v53
    %v55 = vrot.slane %v50, %v54
    %vm57 = vcmask 130048
    %v59 = vsel %vm57, %v48, 0
    %61 = vmatprep.subr.bf16.mxu0 0
    %62 = vmatpush1.bf16.msra.mxu0 %v49
    %63 = vmatprep.subr.bf16.mxu0 0
    %64 = vmatpush1.bf16.msra.mxu0 0
    %65 = vmatprep.subr.bf16.mxu0 0
    %66 = vmatpush1.bf16.msra.mxu0 0
    %67 = vmatprep.subr.bf16.mxu0 0
    %68 = vmatpush1.bf16.msra.mxu0 0
    %69 = vmatprep.subr.bf16.mxu0 0
    %70 = vmatpush1.bf16.msra.mxu0 0
    %71 = vmatprep.subr.bf16.mxu0 0
    %72 = vmatpush1.bf16.msra.mxu0 0
    %73 = vmatprep.subr.bf16.mxu0 0
    %74 = vmatpush1.bf16.msra.mxu0 0
    %75 = vmatprep.subr.bf16.mxu0 0
    %76 = vmatpush1.bf16.msra.mxu0 0
    %77 = vmatprep.subr.bf16.mxu0 0
    %78 = vmatpush1.bf16.msra.mxu0 0
    %79 = vmatprep.subr.bf16.mxu0 0
    %80 = vmatpush1.bf16.msra.mxu0 0
    %81 = vmatprep.subr.bf16.mxu0 0
    %82 = vmatpush1.bf16.msra.mxu0 0
    %83 = vmatprep.subr.bf16.mxu0 0
    %84 = vmatpush1.bf16.msra.mxu0 0
    %85 = vmatprep.subr.bf16.mxu0 0
    %86 = vmatpush1.bf16.msra.mxu0 0
    %87 = vmatprep.subr.bf16.mxu0 0
    %88 = vmatpush1.bf16.msra.mxu0 0
    %89 = vmatprep.subr.bf16.mxu0 0
    %90 = vmatpush1.bf16.msra.mxu0 0
    %91 = vmatprep.subr.bf16.mxu0 0
    %92 = vmatpush1.bf16.msra.mxu0 0
    %93 = vmatprep.mubr.bf16.mxu0 0
    %94 = vmatmul.mubr.bf16.gmra.mrb[0].mxu0 %v59
    %v95 = vpop.f32.mrb[0].mxu0
    %v96 = vadd.f32 %v55, %v95
    %v97 = vpop.f32.mrb[0].mxu0
    %v98 = vpop.f32.mrb[0].mxu0
    %v99 = vadd.f32 %v55, %v98
    %v100 = vpop.f32.mrb[0].mxu0
    %101 = vdwg.mxu0
    %v102 = vmul.f32 %v96, %v96
    %v103 = vmul.f32 %v99, %v99
    %vm104 = vcmask 261120
    %v105 = vsel %vm104, %v102, 0.0
    %106 = vadd.xlane.f32.xlu0 %v105
    %v107 = vpop.xlane.xlu0 %106
    %v108 = vsel %vm104, %v103, 0.0
    %109 = vadd.xlane.f32.xlu0 %v108
    %v110 = vpop.xlane.xlu0 %109
    %v111 = vrsqrt.pop %v107
    %v112 = vmul.f32 %v107, %v111
    %vm113 = vcmp.eq.f32.partialorder %v107, inf
    %v114 = vsel %vm113, %v107, %v112
    %vm115 = vcmp.eq.f32.partialorder %v107, 0.0
    %v116 = vand.u32 %v107, 2147483648
    %v117 = vsel %vm115, %v116, %v114
    %v118 = vrsqrt.pop %v110
    %v119 = vmul.f32 %v110, %v118
    %vm120 = vcmp.eq.f32.partialorder %v110, inf
    %v121 = vsel %vm120, %v110, %v119
    %vm122 = vcmp.eq.f32.partialorder %v110, 0.0
    %v123 = vand.u32 %v110, 2147483648
    %v124 = vsel %vm122, %v123, %v121
    %v125 = vadd.f32 %v117, 1e-08
    %v126 = vadd.f32 %v124, 1e-08
    %v127 = vrcp.pop %v125
    %v128 = vrcp.pop %v126
    %v129 = vmul.f32 %v96, %v127
    %v130 = vmul.f32 %v99, %v128
    %131 = vst.msk [vmem:[#allocation7] sm:$0xff] %vm104, %v129
    %132 = vst.msk [vmem:[#allocation7 + $0x8] sm:$0xff] %vm104, %v130
    // Predicated region
    $region22: #{tpu_custom_call.1} parent=1 // pred_check
      _
    $region23: #{tpu_custom_call.1} parent=1 // pred_check_branch
      %134 = sbr.rel (0) target = $region25
    $region24: #{tpu_custom_call.1} parent=1 // pred_region
      %s136 = ssub.s32 256, 256
      %137 = vsyncadd [#allocation4], %s136
      %s138 = sshll.u32 [#allocation7], 4
      %s139 = int_to_ptr.vmem [resolvable:$true] %s138
      %144 = dma.vmem_to_hbm [thread:$0]  %s139, 256, %s3, [#allocation4], 128, 128, 8
    $region25: #{tpu_custom_call.1} parent=1 // pred_fallthru
      _
    // Predicated region
    $region26: #{tpu_custom_call.1} parent=1 // pred_check
      _
    $region27: #{tpu_custom_call.1} parent=1 // pred_check_branch
      %146 = sbr.rel (0) target = $region29
    $region28: #{tpu_custom_call.1} parent=1 // pred_region
      %147 = dma.done [#allocation4], 256
    $region29: #{tpu_custom_call.1} parent=1 // pred_fallthru
      _
    %148 = vsyncpa [#allocation3], 1
    %149 = vsyncpa [#allocation6], 1
    %150 = vsyncpa [#allocation4], 1

</llo_original>
